<compile_context>
chip_gen: v6e
topology: v6e:2x2x1
jax: 0.10.0
libtpu: 0.0.40
codegen_flags: <defaults>
</compile_context>

<pallas_src>
import functools
import math

import jax
import jax.numpy as jnp
from jax.experimental import pallas as pl
from jax.experimental.pallas import tpu as pltpu


def _cdiv(a, b):
    return -(-a // b)


def _chip_profile():
    """Per-generation tiling / VMEM knobs for this memory-bound kernel."""
    kind = ""
    try:
        kind = jax.devices()[0].device_kind.lower()
    except Exception:
        pass
    if "v7" in kind or "7x" in kind:
        # 2 TensorCores, 64 MiB VMEM per TC (32 MiB scoped default):
        # modest tiles, many (preferably even) grid steps for core balance.
        return dict(target_in_bytes=2 << 20, vmem_cap=48 << 20,
                    min_steps=8, prefer_even_steps=True)
    if "v6" in kind:
        # 1 TC, 128 MiB VMEM, 1.4 TB/s HBM: big tiles, few steps.
        return dict(target_in_bytes=6 << 20, vmem_cap=100 << 20,
                    min_steps=3, prefer_even_steps=False)
    if "v5" in kind:
        # 1 TC, 128 MiB physical VMEM (16 MiB scoped default -> raise limit).
        return dict(target_in_bytes=4 << 20, vmem_cap=100 << 20,
                    min_steps=3, prefer_even_steps=False)
    # Unknown chip: conservative settings that fit every generation.
    return dict(target_in_bytes=2 << 20, vmem_cap=48 << 20,
                min_steps=4, prefer_even_steps=True)


def _logit_kernel(*refs, num_segments):
    """Elementwise sigmoid + per-row log-det, all in VMEM.

    Folded path refs:   (sel_ref, x_ref, y_ref, logdet_ref)
    Unfolded path refs: (x_ref, y_ref, logdet_ref)
    x/y blocks are (tb, W) with W = num_segments * D; logdet block is
    (tb, num_segments) float32 (lane-dense when folded).
    """
    if num_segments > 1:
        sel_ref, x_ref, y_ref, logdet_ref = refs
    else:
        x_ref, y_ref, logdet_ref = refs

    x = x_ref[...].astype(jnp.float32)
    nax = -jnp.abs(x)
    e = jnp.exp(nax)                       # in (0, 1]; never overflows
    d = 1.0 + e                            # in (1, 2]
    # Divide -> EUP vrcp (free slot) + one Newton step on the VALU; recovers
    # ~f32 precision while keeping the 4 VALU slots mostly free.
    r = pl.reciprocal(d, approx=True)
    r = r * (2.0 - d * r)
    s = jnp.where(x >= 0.0, r, e * r)      # sigmoid(x), stable for any x
    y_ref[...] = s.astype(y_ref.dtype)

    # log(s) + log(1 - s) = -|x| - 2 * log(1 + exp(-|x|))
    term = nax - 2.0 * jnp.log(d)

    if num_segments == 1:
        logdet_ref[...] = jnp.sum(term, axis=-1, keepdims=True).astype(
            logdet_ref.dtype)
    else:
        # Segmented sum over groups of D lanes via one MXU matmul with the
        # resident (W, k) 0/1 selector (hoisted out of the hot loop) ->
        # lane-dense (tb, k) result.  The MXU is otherwise idle here.
        logdet_ref[...] = jnp.dot(
            term, sel_ref[...], preferred_element_type=jnp.float32
        ).astype(logdet_ref.dtype)


def _pick_block_rows(rows, row_in_bytes, *, target_in_bytes, min_steps,
                     prefer_even_steps):
    """Row tile: ~target bytes of input per grid step, multiple of 8, at
    least `min_steps` grid steps when the data allows; whole array in one
    block if it is small.  Optionally nudge toward an even step count."""
    tb = max(8, (target_in_bytes // max(row_in_bytes, 1)) // 8 * 8)
    if min_steps > 1:
        tb = min(tb, max(8, (rows // min_steps) // 8 * 8))
    if rows <= tb:
        return rows
    if prefer_even_steps:
        steps = _cdiv(rows, tb)
        if steps > 1 and steps % 2 == 1:
            tb_even = max(8, _cdiv(_cdiv(rows, steps + 1), 8) * 8)
            if tb_even < rows and _cdiv(rows, tb_even) % 2 == 0:
                tb = tb_even
    return tb


def _vmem_footprint_bytes(tb, w, k, itemsize, folded):
    """Honest per-step VMEM footprint estimate."""
    w_pad = _cdiv(w, 128) * 128
    k_pad = _cdiv(k, 128) * 128
    io = 2 * 2 * tb * w_pad * itemsize      # x + y blocks, double-buffered
    logdet = 2 * tb * k_pad * 4             # logdet block, double-buffered
    scratch = 3 * tb * w_pad * 4            # f32 upcast / exp / `term` (MXU operand)
    sel = (2 * w_pad * k_pad * 4) if folded else 0
    return io + logdet + scratch + sel


def logit_forward(x, cond_inputs=None, mode="direct"):
    """Pallas equivalent of Logit.forward.

    Because of the positional-argument quirk in the reference module, both
    modes execute Sigmoid's 'direct' branch:
        y      = sigmoid(x)
        logdet = sum_{-1} log(sigmoid(x) * (1 - sigmoid(x))), keepdim=True
    """
    del cond_inputs, mode  # accepted for API parity only
    orig_shape = x.shape
    D = orig_shape[-1]
    B = math.prod(orig_shape[:-1]) if len(orig_shape) > 1 else 1
    itemsize = jnp.dtype(x.dtype).itemsize
    prof = _chip_profile()

    # Lane-dense fold: pack k = 128 // gcd(D, 128) rows side by side (free,
    # contiguous reshape) so blocks use all 128 lanes and the logdet store is
    # lane-dense.  Guard B % k == 0 so rows never mix across segments; cap W
    # so the resident selector stays tiny.
    k = 128 // math.gcd(D, 128)
    if not (k > 1 and B % k == 0 and k * D <= 2048):
        k = 1
    R, W = B // k, k * D

    row_in_bytes = _cdiv(W, 128) * 128 * itemsize   # VMEM pads lanes to 128
    tb = _pick_block_rows(R, row_in_bytes,
                          target_in_bytes=prof["target_in_bytes"],
                          min_steps=prof["min_steps"],
                          prefer_even_steps=prof["prefer_even_steps"])
    grid = (_cdiv(R, tb),)                  # partial last block handled by Pallas

    footprint = _vmem_footprint_bytes(tb, W, k, itemsize, k > 1)
    vmem_limit = int(min(prof["vmem_cap"], max(32 << 20, 2 * footprint)))

    kernel = functools.partial(_logit_kernel, num_segments=k)

    inputs = []
    in_specs = []
    if k > 1:
        lane = jnp.arange(W, dtype=jnp.int32)[:, None]
        col = jnp.arange(k, dtype=jnp.int32)[None, :]
        sel = (lane // D == col).astype(jnp.float32)     # (W, k) 0/1 selector
        inputs.append(sel)
        in_specs.append(pl.BlockSpec((W, k), lambda i: (0, 0)))  # resident
    inputs.append(x.reshape(R, W))
    in_specs.append(pl.BlockSpec((tb, W), lambda i: (i, 0)))

    y2, logdet2 = pl.pallas_call(
        kernel,
        out_shape=(
            jax.ShapeDtypeStruct((R, W), x.dtype),
            # float32 log-det: avoids a lossy cast of the D-term reduction.
            jax.ShapeDtypeStruct((R, k), jnp.float32),
        ),
        grid_spec=pltpu.PrefetchScalarGridSpec(
            num_scalar_prefetch=0,
            grid=grid,
            in_specs=in_specs,
            out_specs=[
                pl.BlockSpec((tb, W), lambda i: (i, 0)),
                pl.BlockSpec((tb, k), lambda i: (i, 0)),
            ],
        ),
        compiler_params=pltpu.CompilerParams(
            dimension_semantics=("parallel",),
            vmem_limit_bytes=vmem_limit,
        ),
        cost_estimate=pl.CostEstimate(
            flops=12 * B * D,
            transcendentals=2 * B * D,
            bytes_accessed=2 * B * D * itemsize + B * 4,
        ),
    )(*inputs)

    y = y2.reshape(orig_shape)
    logdet = logdet2.reshape(orig_shape[:-1] + (1,))
    return y, logdet


def _reference(x):
    # Literal formulation from the PyTorch module (Sigmoid 'direct' branch).
    xf = x.astype(jnp.float32)
    s = 1.0 / (1.0 + jnp.exp(-xf))
    return s, jnp.sum(jnp.log(s * (1.0 - s)), axis=-1, keepdims=True)


if __name__ == "__main__":
    key = jax.random.PRNGKey(0)
    # Cases cover: gcd-fold (D=32 and D=96), multi-step grid with a partial
    # tail, >2-D input, the unfolded masked path, and bf16 I/O.
    cases = [
        ((8, 32), jnp.float32),
        ((8, 96), jnp.float32),
        ((72, 32), jnp.float32),
        ((2, 4, 16), jnp.float32),
        ((8, 7), jnp.float32),
        ((16, 96), jnp.bfloat16),
    ]
    for idx, (shape, dtype) in enumerate(cases):
        kb = jax.random.fold_in(key, idx)
        x = jax.random.uniform(kb, shape, dtype=jnp.float32,
                               minval=0.05, maxval=0.95).astype(dtype)

        y, logdet = logit_forward(x)
        jax.block_until_ready((y, logdet))

        y_ref, logdet_ref = _reference(x)
        assert y.shape == shape and logdet.shape == shape[:-1] + (1,), shape
        y_tol = 1e-5 if dtype == jnp.float32 else 1e-2
        ld_atol = 1e-4 if dtype == jnp.float32 else 1e-2
        assert jnp.allclose(y.astype(jnp.float32), y_ref,
                            atol=y_tol, rtol=y_tol), (shape, dtype)
        assert jnp.allclose(logdet, logdet_ref,
                            atol=ld_atol, rtol=1e-4), (shape, dtype)

    print("KERNEL_OK")
</pallas_src>

<mosaic_0001>
module attributes {stable_mosaic.version = 11 : i64} {
  func.func @_logit_kernel(%arg0: i32, %arg1: memref<128x4xf32, #tpu.memory_space<vmem>>, %arg2: memref<2x128xf32, #tpu.memory_space<vmem>>, %arg3: memref<2x128xf32, #tpu.memory_space<vmem>>, %arg4: memref<2x4xf32, #tpu.memory_space<vmem>>) attributes {dimension_semantics = [#tpu.dimension_semantics<parallel>], iteration_bounds = array<i64: 1>, scalar_prefetch = 0 : i64, scratch_operands = 0 : i64, tpu.core_type = #tpu.core_type<tc>, window_params = [{pipeline_mode = #tpu.pipeline_mode<synchronous>, transform_indices = @transform_0, window_bounds = array<i64: 128, 4>}, {transform_indices = @transform_1, window_bounds = array<i64: 2, 128>}, {transform_indices = @transform_2, window_bounds = array<i64: 2, 128>}, {transform_indices = @transform_3, window_bounds = array<i64: 2, 4>}]} {
    %c0 = arith.constant 0 : index
    %c0_0 = arith.constant 0 : index
    %0 = vector.load %arg2[%c0, %c0_0] : memref<2x128xf32, #tpu.memory_space<vmem>>, vector<2x128xf32>
    %1 = math.absf %0 : vector<2x128xf32>
    %cst = arith.constant 0.000000e+00 : f32
    %2 = vector.broadcast %cst : f32 to vector<2x128xf32>
    %3 = arith.subf %2, %1 : vector<2x128xf32>
    %4 = math.exp %3 : vector<2x128xf32>
    %cst_1 = arith.constant 1.000000e+00 : f32
    %5 = vector.broadcast %cst_1 : f32 to vector<2x128xf32>
    %6 = arith.addf %5, %4 : vector<2x128xf32>
    %7 = tpu.reciprocal %6 {approx = true} : vector<2x128xf32> -> vector<2x128xf32>
    %8 = arith.mulf %6, %7 : vector<2x128xf32>
    %cst_2 = arith.constant 2.000000e+00 : f32
    %9 = vector.broadcast %cst_2 : f32 to vector<2x128xf32>
    %10 = arith.subf %9, %8 : vector<2x128xf32>
    %11 = arith.mulf %7, %10 : vector<2x128xf32>
    %cst_3 = arith.constant 0.000000e+00 : f32
    %12 = vector.broadcast %cst_3 : f32 to vector<2x128xf32>
    %13 = arith.cmpf oge, %0, %12 : vector<2x128xf32>
    %14 = arith.mulf %4, %11 : vector<2x128xf32>
    %15 = arith.select %13, %11, %14 : vector<2x128xi1>, vector<2x128xf32>
    %c0_4 = arith.constant 0 : index
    %c0_5 = arith.constant 0 : index
    %16 = vector.load %arg3[%c0_4, %c0_5] : memref<2x128xf32, #tpu.memory_space<vmem>>, vector<2x128xf32>
    tpu.vector_store %arg3[%c0_4, %c0_5], %15 {strides = array<i32>} : memref<2x128xf32, #tpu.memory_space<vmem>>, vector<2x128xf32>,
    %17 = math.log %6 : vector<2x128xf32>
    %cst_6 = arith.constant 2.000000e+00 : f32
    %18 = vector.broadcast %cst_6 : f32 to vector<2x128xf32>
    %19 = arith.mulf %18, %17 : vector<2x128xf32>
    %20 = arith.subf %3, %19 : vector<2x128xf32>
    %c0_7 = arith.constant 0 : index
    %c0_8 = arith.constant 0 : index
    %21 = vector.load %arg1[%c0_7, %c0_8] : memref<128x4xf32, #tpu.memory_space<vmem>>, vector<128x4xf32>
    %cst_9 = arith.constant dense<0.000000e+00> : vector<2x4xf32>
    %22 = tpu.matmul %20, %21, %cst_9 {dimension_numbers = #tpu.dot_dimension_numbers<[1], [0], [0], [1], [0, 0, 1, 1], [], []>} : vector<2x128xf32>, vector<128x4xf32>, vector<2x4xf32> -> vector<2x4xf32>
    %c0_10 = arith.constant 0 : index
    %c0_11 = arith.constant 0 : index
    %23 = vector.load %arg4[%c0_10, %c0_11] : memref<2x4xf32, #tpu.memory_space<vmem>>, vector<2x4xf32>
    tpu.vector_store %arg4[%c0_10, %c0_11], %22 {strides = array<i32>} : memref<2x4xf32, #tpu.memory_space<vmem>>, vector<2x4xf32>,
    return
  }
  func.func @transform_0(%arg0: i32) -> (i32, i32) {
    %c0_i32 = arith.constant 0 : i32
    %c0_i32_0 = arith.constant 0 : i32
    %c0_i32_1 = arith.constant 0 : i32
    return %c0_i32, %c0_i32_0 : i32, i32
  }
  func.func @transform_1(%arg0: i32) -> (i32, i32) {
    %c0_i32 = arith.constant 0 : i32
    %c0_i32_0 = arith.constant 0 : i32
    return %arg0, %c0_i32 : i32, i32
  }
  func.func @transform_2(%arg0: i32) -> (i32, i32) {
    %c0_i32 = arith.constant 0 : i32
    %c0_i32_0 = arith.constant 0 : i32
    return %arg0, %c0_i32 : i32, i32
  }
  func.func @transform_3(%arg0: i32) -> (i32, i32) {
    %c0_i32 = arith.constant 0 : i32
    %c0_i32_0 = arith.constant 0 : i32
    return %arg0, %c0_i32 : i32, i32
  }
}

</mosaic_0001>

<llo_original>
// kernel: tpu_custom_call.1
$region0: #{tpu_custom_call.1}
  #allocation0 [shape = 'u32[]', space=smem, size = 0x4, offset = 0x4, fixed_abs, tag = 'smem constant byte address 0x4 - core index']
  #allocation1 [shape = 'u32[144,128]{1,0:T(1,128)}', space=vmem, size = 0x12000, scoped, tag = 'internal scratch']
  %s0 = inlined_call_operand.vmem [shape: f32[128,4], index: 0, kind: input, shape index: {}]
  %s1 = inlined_call_operand.vmem [shape: f32[2,128], index: 1, kind: input, shape index: {}]
  %s2 = inlined_call_operand.hbm [shape: f32[2,128], index: 2, kind: output, shape index: {0}]
  %s3 = inlined_call_operand.hbm [shape: f32[2,4], index: 3, kind: output, shape index: {1}]
  %4 = xla_tuple %s2, %s3
  %s5 = sld [smem:[#allocation0]]
  $region26: #{tpu_custom_call.1} parent=0
    _
  %s7 = ssub.s32 1, %s5
  %s8 = scalar_select 0, %s7, %s5
  $region1: #{tpu_custom_call.1} parent=0
    #allocation2 [shape = 'u8[1024]{0}', space=vmem, size = 0x400, scoped, tag = 'output window, operand 0, single buffered']
    #allocation3 [shape = 's32[1]{0}', space=sflag, size = 0x4, scoped, tag = 'scoped memory for tpu_custom_call.1']
    #allocation4 [shape = 'u8[1024]{0}', space=vmem, size = 0x400, scoped, tag = 'output window, operand 1, single buffered']
    #allocation5 [shape = 's32[1]{0}', space=sflag, size = 0x4, scoped, tag = 'scoped memory for tpu_custom_call.1']
    %9 = vsyncpa [#allocation3], 0
    %10 = vsyncpa [#allocation5], 0
    // Predicated region
    $region2: #{tpu_custom_call.1} parent=1 // pred_check
      _
    $region3: #{tpu_custom_call.1} parent=1 // pred_check_branch
      %12 = sbr.rel (0) target = $region5
    $region4: #{tpu_custom_call.1} parent=1 // pred_region
      _
    $region5: #{tpu_custom_call.1} parent=1 // pred_fallthru
      _
    // Predicated region
    $region6: #{tpu_custom_call.1} parent=1 // pred_check
      _
    $region7: #{tpu_custom_call.1} parent=1 // pred_check_branch
      %14 = sbr.rel (0) target = $region9
    $region8: #{tpu_custom_call.1} parent=1 // pred_region
      _
    $region9: #{tpu_custom_call.1} parent=1 // pred_fallthru
      _
    %v15 = vld [vmem:[%s1] sm:$0x3]
    %v16 = vand.u32 2147483647, %v15
    %v17 = vsub.f32 0.0, %v16
    %v18 = vmul.f32 %v17, 1.442695
    %v19 = vpow.pop %v18
    %v20 = vadd.f32 %v19, 1.0
    %v21 = vrcp.pop %v20
    %v22 = vmul.f32 %v20, %v21
    %v23 = vsub.f32 2.0, %v22
    %v24 = vmul.f32 %v21, %v23
    %vm25 = vcmp.ge.f32.partialorder %v15, 0.0
    %v26 = vmul.f32 %v19, %v24
    %v27 = vsel %vm25, %v24, %v26
    %28 = vst [vmem:[#allocation2] sm:$0x3] %v27
    %v29 = vlog2.pop %v20
    %v30 = vmul.f32 %v29, 0.6931472
    %v31 = vmul.f32 %v30, 2.0
    %v32 = vsub.f32 %v17, %v31
    %v33 = vld [vmem:[%s0] sm:$0xff]
    %v34 = vld [vmem:[%s0 + $0x8] sm:$0xff]
    %v35 = vld [vmem:[%s0 + $0x10] sm:$0xff]
    %v36 = vld [vmem:[%s0 + $0x18] sm:$0xff]
    %v37 = vld [vmem:[%s0 + $0x20] sm:$0xff]
    %v38 = vld [vmem:[%s0 + $0x28] sm:$0xff]
    %v39 = vld [vmem:[%s0 + $0x30] sm:$0xff]
    %v40 = vld [vmem:[%s0 + $0x38] sm:$0xff]
    %v41 = vld [vmem:[%s0 + $0x40] sm:$0xff]
    %v42 = vld [vmem:[%s0 + $0x48] sm:$0xff]
    %v43 = vld [vmem:[%s0 + $0x50] sm:$0xff]
    %v44 = vld [vmem:[%s0 + $0x58] sm:$0xff]
    %v45 = vld [vmem:[%s0 + $0x60] sm:$0xff]
    %v46 = vld [vmem:[%s0 + $0x68] sm:$0xff]
    %v47 = vld [vmem:[%s0 + $0x70] sm:$0xff]
    %v48 = vld [vmem:[%s0 + $0x78] sm:$0xff]
    %49 = vmatprep.subr.mxu0 0.0
    %50 = vmatpush1.msra.mxu0 %v48
    %51 = vmatprep.subr.mxu0 0.0
    %52 = vmatpush1.msra.mxu0 %v47
    %53 = vmatprep.subr.mxu0 0.0
    %54 = vmatpush1.msra.mxu0 %v46
    %55 = vmatprep.subr.mxu0 0.0
    %56 = vmatpush1.msra.mxu0 %v45
    %57 = vmatprep.subr.mxu0 0.0
    %58 = vmatpush1.msra.mxu0 %v44
    %59 = vmatprep.subr.mxu0 0.0
    %60 = vmatpush1.msra.mxu0 %v43
    %61 = vmatprep.subr.mxu0 0.0
    %62 = vmatpush1.msra.mxu0 %v42
    %63 = vmatprep.subr.mxu0 0.0
    %64 = vmatpush1.msra.mxu0 %v41
    %65 = vmatprep.subr.mxu0 0.0
    %66 = vmatpush1.msra.mxu0 %v40
    %67 = vmatprep.subr.mxu0 0.0
    %68 = vmatpush1.msra.mxu0 %v39
    %69 = vmatprep.subr.mxu0 0.0
    %70 = vmatpush1.msra.mxu0 %v38
    %71 = vmatprep.subr.mxu0 0.0
    %72 = vmatpush1.msra.mxu0 %v37
    %73 = vmatprep.subr.mxu0 0.0
    %74 = vmatpush1.msra.mxu0 %v36
    %75 = vmatprep.subr.mxu0 0.0
    %76 = vmatpush1.msra.mxu0 %v35
    %77 = vmatprep.subr.mxu0 0.0
    %78 = vmatpush1.msra.mxu0 %v34
    %79 = vmatprep.subr.mxu0 0.0
    %80 = vmatpush1.msra.mxu0 %v33
    %81 = vmatprep.subr.mxu0 0.0
    %82 = vmatpush2.msra.mxu0 0.0
    %83 = vmatprep.subr.mxu0 0.0
    %84 = vmatpush2.msra.mxu0 0.0
    %85 = vmatprep.subr.mxu0 0.0
    %86 = vmatpush2.msra.mxu0 0.0
    %87 = vmatprep.subr.mxu0 0.0
    %88 = vmatpush2.msra.mxu0 0.0
    %89 = vmatprep.subr.mxu0 0.0
    %90 = vmatpush2.msra.mxu0 0.0
    %91 = vmatprep.subr.mxu0 0.0
    %92 = vmatpush2.msra.mxu0 0.0
    %93 = vmatprep.subr.mxu0 0.0
    %94 = vmatpush2.msra.mxu0 0.0
    %95 = vmatprep.subr.mxu0 0.0
    %96 = vmatpush2.msra.mxu0 0.0
    %97 = vmatprep.subr.mxu0 0.0
    %98 = vmatpush2.msra.mxu0 0.0
    %99 = vmatprep.subr.mxu0 0.0
    %100 = vmatpush2.msra.mxu0 0.0
    %101 = vmatprep.subr.mxu0 0.0
    %102 = vmatpush2.msra.mxu0 0.0
    %103 = vmatprep.subr.mxu0 0.0
    %104 = vmatpush2.msra.mxu0 0.0
    %105 = vmatprep.subr.mxu0 0.0
    %106 = vmatpush2.msra.mxu0 0.0
    %107 = vmatprep.subr.mxu0 0.0
    %108 = vmatpush2.msra.mxu0 0.0
    %109 = vmatprep.subr.mxu0 0.0
    %110 = vmatpush2.msra.mxu0 0.0
    %111 = vmatprep.subr.mxu0 0.0
    %112 = vmatpush2.msra.mxu0 0.0
    %113 = vmatprep.mubr.f32.mxu0 0.0
    %114 = vmatmul.mubr.f32.gmra.mxu0 %v32
    %v115 = vpop.f32.mrf.mxu0
    %v116 = vadd.f32 0.0, %v115
    %v117 = vpop.f32.mrf.mxu0
    %118 = vdwg.mxu0
    %vm119 = vcmask 25600
    %120 = vst.msk [vmem:[#allocation4] sm:$0x3] %vm119, %v116
    // Predicated region
    $region10: #{tpu_custom_call.1} parent=1 // pred_check
      _
    $region11: #{tpu_custom_call.1} parent=1 // pred_check_branch
      %122 = sbr.rel (0) target = $region13
    $region12: #{tpu_custom_call.1} parent=1 // pred_region
      %s124 = ssub.s32 32, 32
      %125 = vsyncadd [#allocation3], %s124
      %s127 = sshll.u32 [#allocation2], 4
      %s128 = int_to_ptr.vmem [resolvable:$true] %s127
      %130 = dma.vmem_to_hbm [thread:$0]  %s128, 32, %s2, [#allocation3]
    $region13: #{tpu_custom_call.1} parent=1 // pred_fallthru
      _
    // Predicated region
    $region14: #{tpu_custom_call.1} parent=1 // pred_check
      _
    $region15: #{tpu_custom_call.1} parent=1 // pred_check_branch
      %132 = sbr.rel (0) target = $region17
    $region16: #{tpu_custom_call.1} parent=1 // pred_region
      %s134 = ssub.s32 32, 32
      %135 = vsyncadd [#allocation5], %s134
      %s137 = sshll.u32 [#allocation4], 4
      %s138 = int_to_ptr.vmem [resolvable:$true] %s137
      %140 = dma.vmem_to_hbm [thread:$0]  %s138, 32, %s3, [#allocation5]
    $region17: #{tpu_custom_call.1} parent=1 // pred_fallthru
      _
    // Predicated region
    $region18: #{tpu_custom_call.1} parent=1 // pred_check
      _
    $region19: #{tpu_custom_call.1} parent=1 // pred_check_branch
      %142 = sbr.rel (0) target = $region21
    $region20: #{tpu_custom_call.1} parent=1 // pred_region
      %143 = dma.done [#allocation3], 32
    $region21: #{tpu_custom_call.1} parent=1 // pred_fallthru
      _
    // Predicated region
    $region22: #{tpu_custom_call.1} parent=1 // pred_check
      _
    $region23: #{tpu_custom_call.1} parent=1 // pred_check_branch
      %145 = sbr.rel (0) target = $region25
    $region24: #{tpu_custom_call.1} parent=1 // pred_region
      %146 = dma.done [#allocation5], 32
    $region25: #{tpu_custom_call.1} parent=1 // pred_fallthru
      _
    %147 = vsyncpa [#allocation3], 1
    %148 = vsyncpa [#allocation5], 1

</llo_original>
